<compile_context>
chip_gen: v7x
topology: tpu7x:2x2x1
jax: 0.10.0
libtpu: 0.0.40
codegen_flags: <defaults>
</compile_context>

<pallas_src>
import jax
import jax.numpy as jnp
from jax.experimental import pallas as pl
from jax.experimental.pallas import tpu as pltpu


def _round_up(x, m):
    return ((x + m - 1) // m) * m


def _device_vmem_policy():
    """Returns (x_tile_budget_bytes, vmem_limit_bytes, is_v7)."""
    try:
        kind = jax.devices()[0].device_kind.lower()
    except Exception:
        kind = ""
    if "v7" in kind:
        # v7x: 64 MiB physical VMEM -> double-buffered x tile <= ~20 MiB total.
        return 10 * 1024 * 1024, 48 * 1024 * 1024, True
    if "v5" in kind or "v6" in kind:
        # v5e / v6e: 128 MiB physical VMEM; big tiles amortize the ~0.35 us/step.
        return 16 * 1024 * 1024, 100 * 1024 * 1024, False
    # Unknown chip: stay within the smallest (v7x-like) envelope.
    return 10 * 1024 * 1024, 48 * 1024 * 1024, False


def _linear_kernel(x_ref, w_ref, b_ref, o_ref):
    # x_ref: (TB, F) VMEM    w_ref: (1, F) VMEM (resident)
    # b_ref: (1,)   SMEM     o_ref: (TB, 1) VMEM
    x = x_ref[...]                       # (TB, F)
    w = w_ref[...]                       # (1, F)
    b = b_ref[0]                         # scalar from SMEM
    F = x.shape[-1]                      # static at trace time
    if F >= 128:
        # MXU path: the vector-extended slot is otherwise idle, and this avoids
        # materializing the full-tile x*w temporary (vreg pressure).
        y = jnp.dot(x, w.T, preferred_element_type=jnp.float32) + b  # (TB, 1)
    else:
        # Small-F VPU path: broadcast-multiply + lane-axis reduce.
        y = jnp.sum(x * w, axis=-1, keepdims=True) + b               # (TB, 1)
    o_ref[...] = y.astype(o_ref.dtype)


def linear_net_forward(x, weight, bias, *, tile_rows=None,
                       small_f_xla_fallback=False):
    """Pallas forward for LinearNet.

    x:      (B, F) float32
    weight: (1, F) float32   (PyTorch nn.Linear weight layout)
    bias:   (1,)   float32
    returns (B, 1) float32
    """
    x = x.astype(jnp.float32)
    B, F = x.shape
    w = weight.reshape(1, F).astype(jnp.float32)
    b = bias.reshape(1).astype(jnp.float32)

    if small_f_xla_fallback and F < 128:
        # At tiny F the (TB, F) layout uses ~F/128 of each vreg; plain XLA is
        # the right tool.  Off by default so the Pallas path is exercised.
        return x @ w.T + b

    x_tile_budget, vmem_limit, is_v7 = _device_vmem_policy()

    if tile_rows is None:
        # Lane-padding-aware VMEM bytes per batch row:
        #   x   : 2 buffers * round_up(F,128) f32 lanes
        #   out : 2 buffers * 128 f32 lanes  (the (TB,1) column pads to 128 lanes)
        bytes_per_row = 2 * 4 * _round_up(F, 128) + 2 * 4 * 128
        rows_fit = max(8, (x_tile_budget // bytes_per_row) // 8 * 8)
        tile_rows = min(_round_up(B, 8), rows_fit)
    TB = max(8, _round_up(tile_rows, 8))

    if is_v7 and B > 8:
        # Guarantee >=2 grid steps so the "parallel" batch axis can be split
        # across both v7x TensorCores.
        while -(-B // TB) < 2 and TB > 8:
            TB = max(8, _round_up(TB // 2, 8))

    grid = (pl.cdiv(B, TB),)   # ragged last block handled by Pallas (no jnp.pad)

    out = pl.pallas_call(
        _linear_kernel,
        out_shape=jax.ShapeDtypeStruct((B, 1), jnp.float32),
        grid=grid,
        in_specs=[
            pl.BlockSpec((TB, F), lambda i: (i, 0)),                 # x tile (streamed)
            pl.BlockSpec((1, F), lambda i: (0, 0)),                  # weight (VMEM-resident)
            pl.BlockSpec(memory_space=pltpu.MemorySpace.SMEM),       # bias scalar
        ],
        out_specs=pl.BlockSpec((TB, 1), lambda i: (i, 0)),
        compiler_params=pltpu.CompilerParams(
            dimension_semantics=("parallel",),
            vmem_limit_bytes=vmem_limit,
        ),
    )(x, w, b)

    return out


if __name__ == "__main__":
    key = jax.random.PRNGKey(0)
    kx, kw, kb, kx2 = jax.random.split(key, 4)

    batch = 8
    n_feature = 2  # classic linear-regression setup from the source script

    x = jax.random.normal(kx, (batch, n_feature), dtype=jnp.float32)
    # Deterministic parameter init (mimics nn.Linear's uniform init bound 1/sqrt(F))
    bound = 1.0 / (n_feature ** 0.5)
    weight = jax.random.uniform(kw, (1, n_feature), dtype=jnp.float32,
                                minval=-bound, maxval=bound)
    bias = jax.random.uniform(kb, (1,), dtype=jnp.float32,
                              minval=-bound, maxval=bound)

    # 1) Small "module-sized" check (single grid step, Pallas path).
    y = linear_net_forward(x, weight, bias)
    jax.block_until_ready(y)
    y_ref = x @ weight.T + bias
    assert y.shape == (batch, 1)
    assert jnp.allclose(y, y_ref, atol=1e-5, rtol=1e-5)

    # 2) Multi-tile check: non-divisible batch exercises the ragged last block
    #    (no host padding) plus the pipelined batch grid.
    batch2 = 300
    x2 = jax.random.normal(kx2, (batch2, n_feature), dtype=jnp.float32)
    y2 = linear_net_forward(x2, weight, bias, tile_rows=128)  # grid of 3 (last ragged)
    jax.block_until_ready(y2)
    y2_ref = x2 @ weight.T + bias
    assert y2.shape == (batch2, 1)
    assert jnp.allclose(y2, y2_ref, atol=1e-5, rtol=1e-5)

    # 3) Default (budget-driven) tile sizing on the larger batch.
    y3 = linear_net_forward(x2, weight, bias)
    jax.block_until_ready(y3)
    assert jnp.allclose(y3, y2_ref, atol=1e-5, rtol=1e-5)

    print("KERNEL_OK")
</pallas_src>

<mosaic_0001>
module attributes {stable_mosaic.version = 11 : i64} {
  func.func @_linear_kernel(%arg0: i32, %arg1: memref<8x2xf32, #tpu.memory_space<vmem>>, %arg2: memref<1x2xf32, #tpu.memory_space<vmem>>, %arg3: memref<1xf32, #tpu.memory_space<smem>>, %arg4: memref<8x1xf32, #tpu.memory_space<vmem>>) attributes {dimension_semantics = [#tpu.dimension_semantics<parallel>], iteration_bounds = array<i64: 1>, scalar_prefetch = 0 : i64, scratch_operands = 0 : i64, tpu.core_type = #tpu.core_type<tc>, window_params = [{transform_indices = @transform_0, window_bounds = array<i64: 8, 2>}, {pipeline_mode = #tpu.pipeline_mode<synchronous>, transform_indices = @transform_1, window_bounds = array<i64: 1, 2>}, {transform_indices = @transform_2, window_bounds = array<i64: 1>}, {transform_indices = @transform_3, window_bounds = array<i64: 8, 1>}]} {
    %c0 = arith.constant 0 : index
    %c0_0 = arith.constant 0 : index
    %0 = vector.load %arg1[%c0, %c0_0] : memref<8x2xf32, #tpu.memory_space<vmem>>, vector<8x2xf32>
    %c0_1 = arith.constant 0 : index
    %c0_2 = arith.constant 0 : index
    %1 = vector.load %arg2[%c0_1, %c0_2] : memref<1x2xf32, #tpu.memory_space<vmem>>, vector<1x2xf32>
    %c0_3 = arith.constant 0 : index
    %2 = memref.load %arg3[%c0_3] : memref<1xf32, #tpu.memory_space<smem>>
    %3 = vector.broadcast %1 : vector<1x2xf32> to vector<8x2xf32>
    %4 = arith.mulf %0, %3 : vector<8x2xf32>
    %cst = arith.constant dense<0.000000e+00> : vector<8xf32>
    %5 = vector.multi_reduction <add>, %4, %cst [1] : vector<8x2xf32> to vector<8xf32>
    %6 = vector.shape_cast %5 : vector<8xf32> to vector<8x1xf32>
    %7 = vector.broadcast %2 : f32 to vector<8x1xf32>
    %8 = arith.addf %6, %7 : vector<8x1xf32>
    %c0_4 = arith.constant 0 : index
    %c0_5 = arith.constant 0 : index
    %9 = vector.load %arg4[%c0_4, %c0_5] : memref<8x1xf32, #tpu.memory_space<vmem>>, vector<8x1xf32>
    tpu.vector_store %arg4[%c0_4, %c0_5], %8 {strides = array<i32>} : memref<8x1xf32, #tpu.memory_space<vmem>>, vector<8x1xf32>,
    return
  }
  func.func @transform_0(%arg0: i32) -> (i32, i32) {
    %c0_i32 = arith.constant 0 : i32
    %c0_i32_0 = arith.constant 0 : i32
    return %arg0, %c0_i32 : i32, i32
  }
  func.func @transform_1(%arg0: i32) -> (i32, i32) {
    %c0_i32 = arith.constant 0 : i32
    %c0_i32_0 = arith.constant 0 : i32
    %c0_i32_1 = arith.constant 0 : i32
    return %c0_i32, %c0_i32_0 : i32, i32
  }
  func.func @transform_2(%arg0: i32) -> i32 {
    %c0_i32 = arith.constant 0 : i32
    %c0_i32_0 = arith.constant 0 : i32
    return %c0_i32 : i32
  }
  func.func @transform_3(%arg0: i32) -> (i32, i32) {
    %c0_i32 = arith.constant 0 : i32
    %c0_i32_0 = arith.constant 0 : i32
    return %arg0, %c0_i32 : i32, i32
  }
}

</mosaic_0001>

<llo_original>
// kernel: tpu_custom_call.1
$region0: #{tpu_custom_call.1}
  #allocation0 [shape = 'u32[]', space=smem, size = 0x4, offset = 0x4, fixed_abs, tag = 'smem constant byte address 0x4 - core index']
  #allocation1 [shape = 'u32[144,128]{1,0:T(1,128)}', space=vmem, size = 0x12000, scoped, tag = 'internal scratch']
  #allocation2 [shape = 'f32[1]{0:T(128)S(6)}', space=smem, size = 0x200, scoped, tag = 'scoped memory for tpu_custom_call.1']
  %s0 = inlined_call_operand.vmem [shape: f32[8,2], index: 0, kind: input, shape index: {}]
  %s1 = inlined_call_operand.vmem [shape: f32[1,2], index: 1, kind: input, shape index: {}]
  %s2 = inlined_call_operand.<no memory space> [shape: f32[1], index: 2, kind: input, shape index: {}]
  %s3 = inlined_call_operand.vmem [shape: f32[8,1], index: 3, kind: output, shape index: {}]
  %s4 = sld [smem:[#allocation0]]
  $region22: #{tpu_custom_call.1} parent=0
    _
  %s6 = ssub.s32 1, %s4
  %s7 = scalar_select 0, %s6, %s4
  %8 = sst [smem:[#allocation2]] %s2
  // Predicated region
  $region2: #{tpu_custom_call.1} parent=0 // pred_check
    _
  $region3: #{tpu_custom_call.1} parent=0 // pred_check_branch
    %10 = sbr.rel (0) target = $region5
  $region4: #{tpu_custom_call.1} parent=0 // pred_region
    _
  $region5: #{tpu_custom_call.1} parent=0 // pred_fallthru
    _
  // Predicated region
  $region6: #{tpu_custom_call.1} parent=0 // pred_check
    _
  $region7: #{tpu_custom_call.1} parent=0 // pred_check_branch
    %12 = sbr.rel (0) target = $region9
  $region8: #{tpu_custom_call.1} parent=0 // pred_region
    _
  $region9: #{tpu_custom_call.1} parent=0 // pred_fallthru
    _
  // Predicated region
  $region10: #{tpu_custom_call.1} parent=0 // pred_check
    _
  $region11: #{tpu_custom_call.1} parent=0 // pred_check_branch
    %14 = sbr.rel (0) target = $region13
  $region12: #{tpu_custom_call.1} parent=0 // pred_region
    _
  $region13: #{tpu_custom_call.1} parent=0 // pred_fallthru
    _
  %v15 = vld [vmem:[%s0] sm:$0xff]
  %v16 = vld [vmem:[%s1] sm:$0x1]
  %s17 = sld [smem:[#allocation2]]
  %v19 = vlaneseq
  %v20 = vshrl.u32 %v19, 7
  %v21 = vsub.s32 0, %v20
  %v22 = vrot.slane %v16, %v21
  %v24 = vmul.f32 %v15, %v22
  %vm25 = vcmask 15360
  %v26 = vsel %vm25, %v24, 0.0
  %27 = vadd.xlane.f32.xlu0 %v26
  %v28 = vpop.xlane.xlu0 %27
  %v29 = vstv %s17
  %v30 = vadd.f32 %v28, %v29
  %vm31 = vcmask 7168
  %32 = vst.msk [vmem:[%s3] sm:$0xff] %vm31, %v30
  // Predicated region
  $region14: #{tpu_custom_call.1} parent=0 // pred_check
    _
  $region15: #{tpu_custom_call.1} parent=0 // pred_check_branch
    %34 = sbr.rel (0) target = $region17
  $region16: #{tpu_custom_call.1} parent=0 // pred_region
    _
  $region17: #{tpu_custom_call.1} parent=0 // pred_fallthru
    _
  // Predicated region
  $region18: #{tpu_custom_call.1} parent=0 // pred_check
    _
  $region19: #{tpu_custom_call.1} parent=0 // pred_check_branch
    %36 = sbr.rel (0) target = $region21
  $region20: #{tpu_custom_call.1} parent=0 // pred_region
    _
  $region21: #{tpu_custom_call.1} parent=0 // pred_fallthru
    _

</llo_original>
